<compile_context>
chip_gen: v5e
topology: v5e:2x2
jax: 0.10.0
libtpu: 0.0.40
codegen_flags: <defaults>
</compile_context>

<pallas_src>
import jax
import jax.numpy as jnp
from jax.experimental import pallas as pl
from jax.experimental.pallas import tpu as pltpu


# ----------------------------- Pallas kernels --------------------------------
def _layer1_kernel(a_ref, x_ref, w1_ref, b1_ref, w2_ref, hw2_ref, acc_ref):
    """acc = sum_k A[i,k] @ X[k]  ;  finalize: hw2 = relu(acc @ W1 + b1) @ W2."""
    k = pl.program_id(1)

    @pl.when(k == 0)
    def _():
        acc_ref[...] = jnp.zeros_like(acc_ref)

    # dominant N^2 matmul in bf16, accumulated in f32
    acc_ref[...] += jnp.dot(a_ref[...], x_ref[...],
                            preferred_element_type=jnp.float32)

    @pl.when(k == pl.num_programs(1) - 1)
    def _():
        h1 = jnp.dot(acc_ref[...], w1_ref[...],
                     preferred_element_type=jnp.float32) + b1_ref[...]
        h1 = jnp.maximum(h1, 0.0)
        hw2 = jnp.dot(h1, w2_ref[...], preferred_element_type=jnp.float32)
        hw2_ref[...] = hw2.astype(hw2_ref.dtype)


def _layer2_kernel(a_ref, hw2_ref, b2_ref, out_ref, acc_ref):
    """acc = sum_k A[i,k] @ hw2[k]  ;  finalize: out = acc + b2."""
    k = pl.program_id(1)

    @pl.when(k == 0)
    def _():
        acc_ref[...] = jnp.zeros_like(acc_ref)

    acc_ref[...] += jnp.dot(a_ref[...], hw2_ref[...],
                            preferred_element_type=jnp.float32)

    @pl.when(k == pl.num_programs(1) - 1)
    def _():
        out_ref[...] = (acc_ref[...] + b2_ref[...]).astype(out_ref.dtype)


# ------------------------------- wrapper --------------------------------------
def _round_up(x, m):
    return ((x + m - 1) // m) * m


def gcn_forward(a_hat, x, w1, b1, w2, b2):
    n, f_in = x.shape
    hid = w1.shape[1]
    out_dim = w2.shape[1]

    # Lane-dense padding: feature axes -> multiples of 128; node axis -> tile.
    LANE = 128
    fp = _round_up(f_in, LANE)
    hp = _round_up(hid, LANE)
    op = _round_up(out_dim, LANE)

    if n > 256:
        tile = 256          # fills the 2x256^2 MXU on v6e/v7x (use 128 on v5e)
    else:
        tile = _round_up(n, 8)   # single tile for small graphs
    n_pad = _round_up(n, tile)
    tm = tk = tile

    # Pad + cast: bf16 for the big MXU operands, f32 for weights/biases.
    a_p = jnp.zeros((n_pad, n_pad), jnp.bfloat16).at[:n, :n].set(
        a_hat.astype(jnp.bfloat16))
    x_p = jnp.zeros((n_pad, fp), jnp.bfloat16).at[:n, :f_in].set(
        x.astype(jnp.bfloat16))
    w1_p = jnp.zeros((fp, hp), jnp.float32).at[:f_in, :hid].set(w1)
    b1_p = jnp.zeros((1, hp), jnp.float32).at[:, :hid].set(b1)
    w2_p = jnp.zeros((hp, op), jnp.float32).at[:hid, :out_dim].set(w2)
    b2_p = jnp.zeros((1, op), jnp.float32).at[:, :out_dim].set(b2)

    grid = (n_pad // tm, n_pad // tk)
    cparams = pltpu.CompilerParams(
        dimension_semantics=("parallel", "arbitrary"),
        vmem_limit_bytes=32 * 1024 * 1024,   # safe on v5e/v6e (128 MiB) & v7x (64 MiB)
    )

    # ---- pass 1: hw2 = relu(A_hat @ X @ W1 + b1) @ W2 (aggregate-first) -----
    cost1 = pl.CostEstimate(
        flops=2 * n_pad * n_pad * fp + 2 * n_pad * fp * hp + 2 * n_pad * hp * op,
        transcendentals=0,
        bytes_accessed=(2 * n_pad * n_pad + 2 * n_pad * fp
                        + 4 * (fp * hp + hp + hp * op) + 2 * n_pad * op),
    )
    hw2 = pl.pallas_call(
        _layer1_kernel,
        out_shape=jax.ShapeDtypeStruct((n_pad, op), jnp.bfloat16),
        grid_spec=pltpu.PrefetchScalarGridSpec(
            num_scalar_prefetch=0,
            grid=grid,
            in_specs=[
                pl.BlockSpec((tm, tk), lambda i, k: (i, k)),   # A_hat tile
                pl.BlockSpec((tk, fp), lambda i, k: (k, 0)),   # X tile
                pl.BlockSpec((fp, hp), lambda i, k: (0, 0)),   # W1 (resident)
                pl.BlockSpec((1, hp), lambda i, k: (0, 0)),    # b1 (resident)
                pl.BlockSpec((hp, op), lambda i, k: (0, 0)),   # W2 (resident)
            ],
            out_specs=pl.BlockSpec((tm, op), lambda i, k: (i, 0)),
            scratch_shapes=[pltpu.VMEM((tm, fp), jnp.float32)],
        ),
        compiler_params=cparams,
        cost_estimate=cost1,
    )(a_p, x_p, w1_p, b1_p, w2_p)

    # ---- pass 2: x_node = A_hat @ hw2 + b2 -----------------------------------
    cost2 = pl.CostEstimate(
        flops=2 * n_pad * n_pad * op,
        transcendentals=0,
        bytes_accessed=(2 * n_pad * n_pad + 2 * n_pad * op + 4 * op
                        + 4 * n_pad * op),
    )
    out = pl.pallas_call(
        _layer2_kernel,
        out_shape=jax.ShapeDtypeStruct((n_pad, op), jnp.float32),
        grid_spec=pltpu.PrefetchScalarGridSpec(
            num_scalar_prefetch=0,
            grid=grid,
            in_specs=[
                pl.BlockSpec((tm, tk), lambda i, k: (i, k)),   # A_hat tile
                pl.BlockSpec((tk, op), lambda i, k: (k, 0)),   # hw2 tile
                pl.BlockSpec((1, op), lambda i, k: (0, 0)),    # b2 (resident)
            ],
            out_specs=pl.BlockSpec((tm, op), lambda i, k: (i, 0)),
            scratch_shapes=[pltpu.VMEM((tm, op), jnp.float32)],
        ),
        compiler_params=cparams,
        cost_estimate=cost2,
    )(a_p, hw2, b2_p)

    # slice away node / lane padding
    return out[:n, :out_dim]


# --------------------------- graph glue (plain JAX) ---------------------------
def build_normalized_adjacency(edge_index, num_nodes):
    """Dense D^{-1/2} (A + I) D^{-1/2}, matching torch_geometric's gcn_norm."""
    src, dst = edge_index[0], edge_index[1]
    loop = jnp.arange(num_nodes, dtype=src.dtype)
    src = jnp.concatenate([src, loop])
    dst = jnp.concatenate([dst, loop])
    ew = jnp.ones(src.shape[0], dtype=jnp.float32)

    deg = jnp.zeros((num_nodes,), jnp.float32).at[dst].add(ew)
    deg_inv_sqrt = jnp.where(deg > 0, jax.lax.rsqrt(deg), 0.0)
    norm = deg_inv_sqrt[src] * ew * deg_inv_sqrt[dst]

    # A_hat[i, j]: weight of message j -> i (aggregated at target i)
    return jnp.zeros((num_nodes, num_nodes), jnp.float32).at[dst, src].add(norm)


# ----------------------------------- main --------------------------------------
if __name__ == "__main__":
    key = jax.random.PRNGKey(0)

    N = 16                       # nodes
    input_node_features = 8
    input_edge_features = 4      # edge branch is dead work (not returned); dropped
    hidden_dim = 32
    output_dim = 16

    # simple bidirectional ring graph -> E = 32 edges
    idx = jnp.arange(N, dtype=jnp.int32)
    src = jnp.concatenate([idx, (idx + 1) % N])
    dst = jnp.concatenate([(idx + 1) % N, idx])
    edge_index = jnp.stack([src, dst])

    k = jax.random.split(key, 6)
    x = jax.random.normal(k[0], (N, input_node_features), jnp.float32)

    def glorot(kk, shape):
        s = jnp.sqrt(6.0 / (shape[0] + shape[1]))
        return jax.random.uniform(kk, shape, jnp.float32, -s, s)

    w1 = glorot(k[1], (input_node_features, hidden_dim))
    b1 = jnp.zeros((1, hidden_dim), jnp.float32)
    w2 = glorot(k[2], (hidden_dim, output_dim))
    b2 = jnp.zeros((1, output_dim), jnp.float32)

    a_hat = build_normalized_adjacency(edge_index, N)

    x_node = jax.jit(gcn_forward)(a_hat, x, w1, b1, w2, b2)
    jax.block_until_ready(x_node)
    assert x_node.shape == (N, output_dim)

    # plain-JAX f32 reference (tolerance accounts for bf16 MXU inputs)
    ref = a_hat @ jnp.maximum(a_hat @ x @ w1 + b1, 0.0) @ w2 + b2
    assert jnp.max(jnp.abs(x_node - ref)) < 1e-1, "mismatch vs reference"

    print("KERNEL_OK")
</pallas_src>

<mosaic_0001>
module attributes {stable_mosaic.version = 11 : i64} {
  func.func @_layer1_kernel(%arg0: i32, %arg1: i32, %arg2: memref<16x16xbf16, #tpu.memory_space<vmem>>, %arg3: memref<16x128xbf16, #tpu.memory_space<vmem>>, %arg4: memref<128x128xf32, #tpu.memory_space<vmem>>, %arg5: memref<1x128xf32, #tpu.memory_space<vmem>>, %arg6: memref<128x128xf32, #tpu.memory_space<vmem>>, %arg7: memref<16x128xbf16, #tpu.memory_space<vmem>>, %arg8: memref<16x128xf32, #tpu.memory_space<vmem>>) attributes {dimension_semantics = [#tpu.dimension_semantics<parallel>, #tpu.dimension_semantics<arbitrary>], iteration_bounds = array<i64: 1, 1>, scalar_prefetch = 0 : i64, scratch_operands = 1 : i64, tpu.core_type = #tpu.core_type<tc>, window_params = [{transform_indices = @transform_0, window_bounds = array<i64: 16, 16>}, {transform_indices = @transform_1, window_bounds = array<i64: 16, 128>}, {pipeline_mode = #tpu.pipeline_mode<synchronous>, transform_indices = @transform_2, window_bounds = array<i64: 128, 128>}, {pipeline_mode = #tpu.pipeline_mode<synchronous>, transform_indices = @transform_3, window_bounds = array<i64: 1, 128>}, {pipeline_mode = #tpu.pipeline_mode<synchronous>, transform_indices = @transform_4, window_bounds = array<i64: 128, 128>}, {transform_indices = @transform_5, window_bounds = array<i64: 16, 128>}]} {
    %c0_i32 = arith.constant 0 : i32
    %0 = arith.cmpi eq, %arg1, %c0_i32 : i32
    %1 = arith.extui %0 : i1 to i32
    %c0_i32_0 = arith.constant 0 : i32
    %2 = arith.cmpi ne, %1, %c0_i32_0 : i32
    scf.if %2 {
      %cst_10 = arith.constant 0.000000e+00 : f32
      %12 = vector.broadcast %cst_10 : f32 to vector<16x128xf32>
      %c0_11 = arith.constant 0 : index
      %c0_12 = arith.constant 0 : index
      %13 = vector.load %arg8[%c0_11, %c0_12] : memref<16x128xf32, #tpu.memory_space<vmem>>, vector<16x128xf32>
      tpu.vector_store %arg8[%c0_11, %c0_12], %12 {strides = array<i32>} : memref<16x128xf32, #tpu.memory_space<vmem>>, vector<16x128xf32>,
    } else {
    }
    %c0 = arith.constant 0 : index
    %c0_1 = arith.constant 0 : index
    %3 = vector.load %arg8[%c0, %c0_1] : memref<16x128xf32, #tpu.memory_space<vmem>>, vector<16x128xf32>
    %c0_2 = arith.constant 0 : index
    %c0_3 = arith.constant 0 : index
    %4 = vector.load %arg2[%c0_2, %c0_3] : memref<16x16xbf16, #tpu.memory_space<vmem>>, vector<16x16xbf16>
    %c0_4 = arith.constant 0 : index
    %c0_5 = arith.constant 0 : index
    %5 = vector.load %arg3[%c0_4, %c0_5] : memref<16x128xbf16, #tpu.memory_space<vmem>>, vector<16x128xbf16>
    %cst = arith.constant dense<0.000000e+00> : vector<16x128xf32>
    %6 = tpu.matmul %4, %5, %cst {dimension_numbers = #tpu.dot_dimension_numbers<[1], [0], [0], [1], [0, 0, 1, 1], [], []>} : vector<16x16xbf16>, vector<16x128xbf16>, vector<16x128xf32> -> vector<16x128xf32>
    %7 = arith.addf %3, %6 : vector<16x128xf32>
    %c0_6 = arith.constant 0 : index
    %c0_7 = arith.constant 0 : index
    %8 = vector.load %arg8[%c0_6, %c0_7] : memref<16x128xf32, #tpu.memory_space<vmem>>, vector<16x128xf32>
    tpu.vector_store %arg8[%c0_6, %c0_7], %7 {strides = array<i32>} : memref<16x128xf32, #tpu.memory_space<vmem>>, vector<16x128xf32>,
    %c0_i32_8 = arith.constant 0 : i32
    %9 = arith.cmpi eq, %arg1, %c0_i32_8 : i32
    %10 = arith.extui %9 : i1 to i32
    %c0_i32_9 = arith.constant 0 : i32
    %11 = arith.cmpi ne, %10, %c0_i32_9 : i32
    scf.if %11 {
      %c0_10 = arith.constant 0 : index
      %c0_11 = arith.constant 0 : index
      %12 = vector.load %arg8[%c0_10, %c0_11] : memref<16x128xf32, #tpu.memory_space<vmem>>, vector<16x128xf32>
      %c0_12 = arith.constant 0 : index
      %c0_13 = arith.constant 0 : index
      %13 = vector.load %arg4[%c0_12, %c0_13] : memref<128x128xf32, #tpu.memory_space<vmem>>, vector<128x128xf32>
      %cst_14 = arith.constant dense<0.000000e+00> : vector<16x128xf32>
      %14 = tpu.matmul %12, %13, %cst_14 {dimension_numbers = #tpu.dot_dimension_numbers<[1], [0], [0], [1], [0, 0, 1, 1], [], []>} : vector<16x128xf32>, vector<128x128xf32>, vector<16x128xf32> -> vector<16x128xf32>
      %c0_15 = arith.constant 0 : index
      %c0_16 = arith.constant 0 : index
      %15 = vector.load %arg5[%c0_15, %c0_16] : memref<1x128xf32, #tpu.memory_space<vmem>>, vector<1x128xf32>
      %16 = vector.broadcast %15 : vector<1x128xf32> to vector<16x128xf32>
      %17 = arith.addf %14, %16 : vector<16x128xf32>
      %cst_17 = arith.constant 0.000000e+00 : f32
      %18 = vector.broadcast %cst_17 : f32 to vector<16x128xf32>
      %19 = arith.maximumf %17, %18 : vector<16x128xf32>
      %c0_18 = arith.constant 0 : index
      %c0_19 = arith.constant 0 : index
      %20 = vector.load %arg6[%c0_18, %c0_19] : memref<128x128xf32, #tpu.memory_space<vmem>>, vector<128x128xf32>
      %cst_20 = arith.constant dense<0.000000e+00> : vector<16x128xf32>
      %21 = tpu.matmul %19, %20, %cst_20 {dimension_numbers = #tpu.dot_dimension_numbers<[1], [0], [0], [1], [0, 0, 1, 1], [], []>} : vector<16x128xf32>, vector<128x128xf32>, vector<16x128xf32> -> vector<16x128xf32>
      %22 = arith.truncf %21 : vector<16x128xf32> to vector<16x128xbf16>
      %c0_21 = arith.constant 0 : index
      %c0_22 = arith.constant 0 : index
      %23 = vector.load %arg7[%c0_21, %c0_22] : memref<16x128xbf16, #tpu.memory_space<vmem>>, vector<16x128xbf16>
      tpu.vector_store %arg7[%c0_21, %c0_22], %22 {strides = array<i32>} : memref<16x128xbf16, #tpu.memory_space<vmem>>, vector<16x128xbf16>,
    } else {
    }
    return
  }
  func.func @transform_0(%arg0: i32, %arg1: i32) -> (i32, i32) {
    %c0_i32 = arith.constant 0 : i32
    return %arg0, %arg1 : i32, i32
  }
  func.func @transform_1(%arg0: i32, %arg1: i32) -> (i32, i32) {
    %c0_i32 = arith.constant 0 : i32
    %c0_i32_0 = arith.constant 0 : i32
    return %arg1, %c0_i32 : i32, i32
  }
  func.func @transform_2(%arg0: i32, %arg1: i32) -> (i32, i32) {
    %c0_i32 = arith.constant 0 : i32
    %c0_i32_0 = arith.constant 0 : i32
    %c0_i32_1 = arith.constant 0 : i32
    return %c0_i32, %c0_i32_0 : i32, i32
  }
  func.func @transform_3(%arg0: i32, %arg1: i32) -> (i32, i32) {
    %c0_i32 = arith.constant 0 : i32
    %c0_i32_0 = arith.constant 0 : i32
    %c0_i32_1 = arith.constant 0 : i32
    return %c0_i32, %c0_i32_0 : i32, i32
  }
  func.func @transform_4(%arg0: i32, %arg1: i32) -> (i32, i32) {
    %c0_i32 = arith.constant 0 : i32
    %c0_i32_0 = arith.constant 0 : i32
    %c0_i32_1 = arith.constant 0 : i32
    return %c0_i32, %c0_i32_0 : i32, i32
  }
  func.func @transform_5(%arg0: i32, %arg1: i32) -> (i32, i32) {
    %c0_i32 = arith.constant 0 : i32
    %c0_i32_0 = arith.constant 0 : i32
    return %arg0, %c0_i32 : i32, i32
  }
}

module attributes {stable_mosaic.version = 11 : i64} {
  func.func @_layer2_kernel(%arg0: i32, %arg1: i32, %arg2: memref<16x16xbf16, #tpu.memory_space<vmem>>, %arg3: memref<16x128xbf16, #tpu.memory_space<vmem>>, %arg4: memref<1x128xf32, #tpu.memory_space<vmem>>, %arg5: memref<16x128xf32, #tpu.memory_space<vmem>>, %arg6: memref<16x128xf32, #tpu.memory_space<vmem>>) attributes {dimension_semantics = [#tpu.dimension_semantics<parallel>, #tpu.dimension_semantics<arbitrary>], iteration_bounds = array<i64: 1, 1>, scalar_prefetch = 0 : i64, scratch_operands = 1 : i64, tpu.core_type = #tpu.core_type<tc>, window_params = [{transform_indices = @transform_0, window_bounds = array<i64: 16, 16>}, {transform_indices = @transform_1, window_bounds = array<i64: 16, 128>}, {pipeline_mode = #tpu.pipeline_mode<synchronous>, transform_indices = @transform_2, window_bounds = array<i64: 1, 128>}, {transform_indices = @transform_3, window_bounds = array<i64: 16, 128>}]} {
    %c0_i32 = arith.constant 0 : i32
    %0 = arith.cmpi eq, %arg1, %c0_i32 : i32
    %1 = arith.extui %0 : i1 to i32
    %c0_i32_0 = arith.constant 0 : i32
    %2 = arith.cmpi ne, %1, %c0_i32_0 : i32
    scf.if %2 {
      %cst_10 = arith.constant 0.000000e+00 : f32
      %12 = vector.broadcast %cst_10 : f32 to vector<16x128xf32>
      %c0_11 = arith.constant 0 : index
      %c0_12 = arith.constant 0 : index
      %13 = vector.load %arg6[%c0_11, %c0_12] : memref<16x128xf32, #tpu.memory_space<vmem>>, vector<16x128xf32>
      tpu.vector_store %arg6[%c0_11, %c0_12], %12 {strides = array<i32>} : memref<16x128xf32, #tpu.memory_space<vmem>>, vector<16x128xf32>,
    } else {
    }
    %c0 = arith.constant 0 : index
    %c0_1 = arith.constant 0 : index
    %3 = vector.load %arg6[%c0, %c0_1] : memref<16x128xf32, #tpu.memory_space<vmem>>, vector<16x128xf32>
    %c0_2 = arith.constant 0 : index
    %c0_3 = arith.constant 0 : index
    %4 = vector.load %arg2[%c0_2, %c0_3] : memref<16x16xbf16, #tpu.memory_space<vmem>>, vector<16x16xbf16>
    %c0_4 = arith.constant 0 : index
    %c0_5 = arith.constant 0 : index
    %5 = vector.load %arg3[%c0_4, %c0_5] : memref<16x128xbf16, #tpu.memory_space<vmem>>, vector<16x128xbf16>
    %cst = arith.constant dense<0.000000e+00> : vector<16x128xf32>
    %6 = tpu.matmul %4, %5, %cst {dimension_numbers = #tpu.dot_dimension_numbers<[1], [0], [0], [1], [0, 0, 1, 1], [], []>} : vector<16x16xbf16>, vector<16x128xbf16>, vector<16x128xf32> -> vector<16x128xf32>
    %7 = arith.addf %3, %6 : vector<16x128xf32>
    %c0_6 = arith.constant 0 : index
    %c0_7 = arith.constant 0 : index
    %8 = vector.load %arg6[%c0_6, %c0_7] : memref<16x128xf32, #tpu.memory_space<vmem>>, vector<16x128xf32>
    tpu.vector_store %arg6[%c0_6, %c0_7], %7 {strides = array<i32>} : memref<16x128xf32, #tpu.memory_space<vmem>>, vector<16x128xf32>,
    %c0_i32_8 = arith.constant 0 : i32
    %9 = arith.cmpi eq, %arg1, %c0_i32_8 : i32
    %10 = arith.extui %9 : i1 to i32
    %c0_i32_9 = arith.constant 0 : i32
    %11 = arith.cmpi ne, %10, %c0_i32_9 : i32
    scf.if %11 {
      %c0_10 = arith.constant 0 : index
      %c0_11 = arith.constant 0 : index
      %12 = vector.load %arg6[%c0_10, %c0_11] : memref<16x128xf32, #tpu.memory_space<vmem>>, vector<16x128xf32>
      %c0_12 = arith.constant 0 : index
      %c0_13 = arith.constant 0 : index
      %13 = vector.load %arg4[%c0_12, %c0_13] : memref<1x128xf32, #tpu.memory_space<vmem>>, vector<1x128xf32>
      %14 = vector.broadcast %13 : vector<1x128xf32> to vector<16x128xf32>
      %15 = arith.addf %12, %14 : vector<16x128xf32>
      %c0_14 = arith.constant 0 : index
      %c0_15 = arith.constant 0 : index
      %16 = vector.load %arg5[%c0_14, %c0_15] : memref<16x128xf32, #tpu.memory_space<vmem>>, vector<16x128xf32>
      tpu.vector_store %arg5[%c0_14, %c0_15], %15 {strides = array<i32>} : memref<16x128xf32, #tpu.memory_space<vmem>>, vector<16x128xf32>,
    } else {
    }
    return
  }
  func.func @transform_0(%arg0: i32, %arg1: i32) -> (i32, i32) {
    %c0_i32 = arith.constant 0 : i32
    return %arg0, %arg1 : i32, i32
  }
  func.func @transform_1(%arg0: i32, %arg1: i32) -> (i32, i32) {
    %c0_i32 = arith.constant 0 : i32
    %c0_i32_0 = arith.constant 0 : i32
    return %arg1, %c0_i32 : i32, i32
  }
  func.func @transform_2(%arg0: i32, %arg1: i32) -> (i32, i32) {
    %c0_i32 = arith.constant 0 : i32
    %c0_i32_0 = arith.constant 0 : i32
    %c0_i32_1 = arith.constant 0 : i32
    return %c0_i32, %c0_i32_0 : i32, i32
  }
  func.func @transform_3(%arg0: i32, %arg1: i32) -> (i32, i32) {
    %c0_i32 = arith.constant 0 : i32
    %c0_i32_0 = arith.constant 0 : i32
    return %arg0, %c0_i32 : i32, i32
  }
}

</mosaic_0001>

<llo_original>
// kernel: gcn_forward.3
$region0: #{gcn_forward.3}
  #allocation0 [shape = 'u32[]', space=smem, size = 0x4, offset = 0x4, fixed_abs, tag = 'smem constant byte address 0x4 - core index']
  #allocation1 [shape = 'u32[72,128]{1,0:T(1,128)}', space=vmem, size = 0x9000, scoped, tag = 'internal scratch']
  #allocation2 [shape = 'f32[16,128]{1,0:T(8,128)}', space=vmem, size = 0x2000, scoped, tag = 'scratch operand']
  %s0 = inlined_call_operand.vmem [shape: bf16[16,16], index: 0, kind: input, shape index: {}]
  %s1 = inlined_call_operand.vmem [shape: bf16[16,128], index: 1, kind: input, shape index: {}]
  %s2 = inlined_call_operand.vmem [shape: f32[1,128], index: 2, kind: input, shape index: {}]
  %s3 = inlined_call_operand.hbm [shape: f32[16,128], index: 3, kind: output, shape index: {}]
  %s4 = sld [smem:[#allocation0]]
  $region30: #{gcn_forward.3} parent=0
    _
  %s6 = ssub.s32 1, %s4
  %s7 = scalar_select 0, %s6, %s4
  $region1: #{gcn_forward.3} parent=0
    #allocation3 [shape = 'u8[8192]{0}', space=vmem, size = 0x2000, scoped, tag = 'output window, operand 0, single buffered']
    #allocation4 [shape = 's32[1]{0}', space=sflag, size = 0x4, scoped, tag = 'scoped memory for gcn_forward.3']
    %8 = vsyncpa [#allocation4], 0
    // Predicated region
    $region2: #{gcn_forward.3} parent=1 // pred_check
      _
    $region3: #{gcn_forward.3} parent=1 // pred_check_branch
      %10 = sbr.rel (0) target = $region5
    $region4: #{gcn_forward.3} parent=1 // pred_region
      _
    $region5: #{gcn_forward.3} parent=1 // pred_fallthru
      _
    // Predicated region
    $region6: #{gcn_forward.3} parent=1 // pred_check
      _
    $region7: #{gcn_forward.3} parent=1 // pred_check_branch
      %12 = sbr.rel (0) target = $region9
    $region8: #{gcn_forward.3} parent=1 // pred_region
      _
    $region9: #{gcn_forward.3} parent=1 // pred_fallthru
      _
    // Predicated region
    $region10: #{gcn_forward.3} parent=1 // pred_check
      _
    $region11: #{gcn_forward.3} parent=1 // pred_check_branch
      %14 = sbr.rel (0) target = $region13
    $region12: #{gcn_forward.3} parent=1 // pred_region
      _
    $region13: #{gcn_forward.3} parent=1 // pred_fallthru
      _
    %p16 = scmp.eq.s32.totalorder 0, 0
    // Predicated region
    $region14: #{gcn_forward.3} parent=1 // pred_check
      %p17 = pneg %p16
    $region15: #{gcn_forward.3} parent=1 // pred_check_branch
      %19 = sbr.rel (%p17) target = $region17
    $region16: #{gcn_forward.3} parent=1 // pred_region
      %20 = vst [vmem:[#allocation2] sm:$0xff] 0.0
      %21 = vst [vmem:[#allocation2 + $0x8] sm:$0xff] 0.0
    $region17: #{gcn_forward.3} parent=1 // pred_fallthru
      _
    %v22 = vld [vmem:[#allocation2] sm:$0xff]
    %v23 = vld [vmem:[#allocation2 + $0x8] sm:$0xff]
    %v24 = vld [vmem:[%s0] sm:$0xf]
    %v25 = vld [vmem:[%s0 + $0x4] sm:$0xf]
    %v26 = vld [vmem:[%s1] sm:$0xf]
    %v27 = vld [vmem:[%s1 + $0x4] sm:$0xf]
    %v30 = vunpack.c.l.b16 %v24
    %v31 = vunpack.c.l.b16 %v25
    %v32 = vpack.c.b16 %v31, %v30
    %v35 = vunpack.c.l.b16 %v26
    %v36 = vunpack.c.l.b16 %v27
    %v37 = vpack.c.b16 %v36, %v35
    %vm39 = vcmask 130048
    %v41 = vsel %vm39, %v32, 0
    %43 = vmatpush.bf16.msra.mxu0 0
    %44 = vmatpush.bf16.msra.mxu0 0
    %45 = vmatpush.bf16.msra.mxu0 0
    %46 = vmatpush.bf16.msra.mxu0 0
    %47 = vmatpush.bf16.msra.mxu0 0
    %48 = vmatpush.bf16.msra.mxu0 0
    %49 = vmatpush.bf16.msra.mxu0 0
    %50 = vmatpush.bf16.msra.mxu0 %v37
    %51 = vmatmul.bf16.gmra.mxu0 %v41
    %v52 = vpop.f32.mrf.mxu0
    %v53 = vadd.f32 0.0, %v52
    %v54 = vpop.f32.mrf.mxu0
    %v55 = vadd.f32 0.0, %v54
    %56 = vdwg.mxu0
    %v57 = vadd.f32 %v22, %v53
    %v58 = vadd.f32 %v23, %v55
    %59 = vst [vmem:[#allocation2] sm:$0xff] %v57
    %60 = vst [vmem:[#allocation2 + $0x8] sm:$0xff] %v58
    // Predicated region
    $region18: #{gcn_forward.3} parent=1 // pred_check
      %p61 = pneg %p16
    $region19: #{gcn_forward.3} parent=1 // pred_check_branch
      %63 = sbr.rel (%p61) target = $region21
    $region20: #{gcn_forward.3} parent=1 // pred_region
      %v64 = vld [vmem:[#allocation2] sm:$0xff]
      %v65 = vld [vmem:[#allocation2 + $0x8] sm:$0xff]
      %v66 = vld [vmem:[%s2] sm:$0x1]
      %v68 = vperm.slane %v66, 0
      %v70 = vadd.f32 %v64, %v68
      %v71 = vadd.f32 %v65, %v68
      %72 = vst [vmem:[#allocation3] sm:$0xff] %v70
      %73 = vst [vmem:[#allocation3 + $0x8] sm:$0xff] %v71
    $region21: #{gcn_forward.3} parent=1 // pred_fallthru
      _
    // Predicated region
    $region22: #{gcn_forward.3} parent=1 // pred_check
      _
    $region23: #{gcn_forward.3} parent=1 // pred_check_branch
      %75 = sbr.rel (0) target = $region25
    $region24: #{gcn_forward.3} parent=1 // pred_region
      %77 = vsyncadd [#allocation4], 0
      %s78 = sshll.u32 [#allocation3], 4
      %s79 = int_to_ptr.vmem [resolvable:$true] %s78
      %s80 = sshll.u32 %s3, 4
      %s81 = int_to_ptr.hbm [resolvable:$true] %s80
      %86 = dma.vmem_to_hbm [thread:$0]  %s79, 256, %s81, [#allocation4], 128, 128, 8
    $region25: #{gcn_forward.3} parent=1 // pred_fallthru
      _
    // Predicated region
    $region26: #{gcn_forward.3} parent=1 // pred_check
      _
    $region27: #{gcn_forward.3} parent=1 // pred_check_branch
      %88 = sbr.rel (0) target = $region29
    $region28: #{gcn_forward.3} parent=1 // pred_region
      %90 = dma.done [#allocation4], 256
    $region29: #{gcn_forward.3} parent=1 // pred_fallthru
      _
    %91 = vsyncpa [#allocation4], 1

// kernel: gcn_forward.2
$region0: #{gcn_forward.2}
  #allocation0 [shape = 'u32[]', space=smem, size = 0x4, offset = 0x4, fixed_abs, tag = 'smem constant byte address 0x4 - core index']
  #allocation1 [shape = 'u32[72,128]{1,0:T(1,128)}', space=vmem, size = 0x9000, scoped, tag = 'internal scratch']
  #allocation2 [shape = 'f32[16,128]{1,0:T(8,128)}', space=vmem, size = 0x2000, scoped, tag = 'scratch operand']
  %s0 = inlined_call_operand.vmem [shape: bf16[16,16], index: 0, kind: input, shape index: {}]
  %s1 = inlined_call_operand.vmem [shape: bf16[16,128], index: 1, kind: input, shape index: {}]
  %s2 = inlined_call_operand.vmem [shape: f32[128,128], index: 2, kind: input, shape index: {}]
  %s3 = inlined_call_operand.vmem [shape: f32[1,128], index: 3, kind: input, shape index: {}]
  %s4 = inlined_call_operand.vmem [shape: f32[128,128], index: 4, kind: input, shape index: {}]
  %s5 = inlined_call_operand.vmem [shape: bf16[16,128], index: 5, kind: output, shape index: {}]
  %s6 = sld [smem:[#allocation0]]
  $region38: #{gcn_forward.2} parent=0
    _
  %s8 = ssub.s32 1, %s6
  %s9 = scalar_select 0, %s8, %s6
  // Predicated region
  $region2: #{gcn_forward.2} parent=0 // pred_check
    _
  $region3: #{gcn_forward.2} parent=0 // pred_check_branch
    %11 = sbr.rel (0) target = $region5
  $region4: #{gcn_forward.2} parent=0 // pred_region
    _
  $region5: #{gcn_forward.2} parent=0 // pred_fallthru
    _
  // Predicated region
  $region6: #{gcn_forward.2} parent=0 // pred_check
    _
  $region7: #{gcn_forward.2} parent=0 // pred_check_branch
    %13 = sbr.rel (0) target = $region9
  $region8: #{gcn_forward.2} parent=0 // pred_region
    _
  $region9: #{gcn_forward.2} parent=0 // pred_fallthru
    _
  // Predicated region
  $region10: #{gcn_forward.2} parent=0 // pred_check
    _
  $region11: #{gcn_forward.2} parent=0 // pred_check_branch
    %15 = sbr.rel (0) target = $region13
  $region12: #{gcn_forward.2} parent=0 // pred_region
    _
  $region13: #{gcn_forward.2} parent=0 // pred_fallthru
    _
  // Predicated region
  $region14: #{gcn_forward.2} parent=0 // pred_check
    _
  $region15: #{gcn_forward.2} parent=0 // pred_check_branch
    %17 = sbr.rel (0) target = $region17
  $region16: #{gcn_forward.2} parent=0 // pred_region
    _
  $region17: #{gcn_forward.2} parent=0 // pred_fallthru
    _
  // Predicated region
  $region18: #{gcn_forward.2} parent=0 // pred_check
    _
  $region19: #{gcn_forward.2} parent=0 // pred_check_branch
    %19 = sbr.rel (0) target = $region21
  $region20: #{gcn_forward.2} parent=0 // pred_region
    _
  $region21: #{gcn_forward.2} parent=0 // pred_fallthru
    _
  %p21 = scmp.eq.s32.totalorder 0, 0
  // Predicated region
  $region22: #{gcn_forward.2} parent=0 // pred_check
    %p22 = pneg %p21
  $region23: #{gcn_forward.2} parent=0 // pred_check_branch
    %24 = sbr.rel (%p22) target = $region25
  $region24: #{gcn_forward.2} parent=0 // pred_region
    %25 = vst [vmem:[#allocation2] sm:$0xff] 0.0
    %26 = vst [vmem:[#allocation2 + $0x8] sm:$0xff] 0.0
  $region25: #{gcn_forward.2} parent=0 // pred_fallthru
    _
  %v27 = vld [vmem:[#allocation2] sm:$0xff]
  %v28 = vld [vmem:[#allocation2 + $0x8] sm:$0xff]
  %v29 = vld [vmem:[%s0] sm:$0xf]
  %v30 = vld [vmem:[%s0 + $0x4] sm:$0xf]
  %v31 = vld [vmem:[%s1] sm:$0xf]
  %v32 = vld [vmem:[%s1 + $0x4] sm:$0xf]
  %v35 = vunpack.c.l.b16 %v29
  %v36 = vunpack.c.l.b16 %v30
  %v37 = vpack.c.b16 %v36, %v35
  %v40 = vunpack.c.l.b16 %v31
  %v41 = vunpack.c.l.b16 %v32
  %v42 = vpack.c.b16 %v41, %v40
  %vm44 = vcmask 130048
  %v46 = vsel %vm44, %v37, 0
  %48 = vmatpush.bf16.msra.mxu0 0
  %49 = vmatpush.bf16.msra.mxu0 0
  %50 = vmatpush.bf16.msra.mxu0 0
  %51 = vmatpush.bf16.msra.mxu0 0
  %52 = vmatpush.bf16.msra.mxu0 0
  %53 = vmatpush.bf16.msra.mxu0 0
  %54 = vmatpush.bf16.msra.mxu0 0
  %55 = vmatpush.bf16.msra.mxu0 %v42
  %56 = vmatmul.bf16.gmra.mxu0 %v46
  %v57 = vpop.f32.mrf.mxu0
  %v58 = vadd.f32 0.0, %v57
  %v59 = vpop.f32.mrf.mxu0
  %v60 = vadd.f32 0.0, %v59
  %61 = vdwg.mxu0
  %v62 = vadd.f32 %v27, %v58
  %v63 = vadd.f32 %v28, %v60
  %64 = vst [vmem:[#allocation2] sm:$0xff] %v62
  %65 = vst [vmem:[#allocation2 + $0x8] sm:$0xff] %v63
  // Predicated region
  $region26: #{gcn_forward.2} parent=0 // pred_check
    %p66 = pneg %p21
  $region27: #{gcn_forward.2} parent=0 // pred_check_branch
    %68 = sbr.rel (%p66) target = $region29
  $region28: #{gcn_forward.2} parent=0 // pred_region
    %v69 = vld [vmem:[#allocation2] sm:$0xff]
    %v70 = vld [vmem:[#allocation2 + $0x8] sm:$0xff]
    %v71 = vld [vmem:[%s2] sm:$0xff]
    %v72 = vld [vmem:[%s2 + $0x8] sm:$0xff]
    %v73 = vld [vmem:[%s2 + $0x10] sm:$0xff]
    %v74 = vld [vmem:[%s2 + $0x18] sm:$0xff]
    %v75 = vld [vmem:[%s2 + $0x20] sm:$0xff]
    %v76 = vld [vmem:[%s2 + $0x28] sm:$0xff]
    %v77 = vld [vmem:[%s2 + $0x30] sm:$0xff]
    %v78 = vld [vmem:[%s2 + $0x38] sm:$0xff]
    %v79 = vld [vmem:[%s2 + $0x40] sm:$0xff]
    %v80 = vld [vmem:[%s2 + $0x48] sm:$0xff]
    %v81 = vld [vmem:[%s2 + $0x50] sm:$0xff]
    %v82 = vld [vmem:[%s2 + $0x58] sm:$0xff]
    %v83 = vld [vmem:[%s2 + $0x60] sm:$0xff]
    %v84 = vld [vmem:[%s2 + $0x68] sm:$0xff]
    %v85 = vld [vmem:[%s2 + $0x70] sm:$0xff]
    %v86 = vld [vmem:[%s2 + $0x78] sm:$0xff]
    %v87 = vld [vmem:[%s3] sm:$0x1]
    %v89 = vperm.slane %v87, 0
    %91 = vmatpush.msra.mxu0 %v86
    %92 = vmatpush.msra.mxu0 %v85
    %93 = vmatpush.msra.mxu0 %v84
    %94 = vmatpush.msra.mxu0 %v83
    %95 = vmatpush.msra.mxu0 %v82
    %96 = vmatpush.msra.mxu0 %v81
    %97 = vmatpush.msra.mxu0 %v80
    %98 = vmatpush.msra.mxu0 %v79
    %99 = vmatpush.msra.mxu0 %v78
    %100 = vmatpush.msra.mxu0 %v77
    %101 = vmatpush.msra.mxu0 %v76
    %102 = vmatpush.msra.mxu0 %v75
    %103 = vmatpush.msra.mxu0 %v74
    %104 = vmatpush.msra.mxu0 %v73
    %105 = vmatpush.msra.mxu0 %v72
    %106 = vmatpush.msra.mxu0 %v71
    %107 = vmatmul.f32.gmra.mxu0 %v69
    %v108 = vpop.f32.mrf.mxu0
    %v109 = vadd.f32 %v89, %v108
    %110 = vmatmul.f32.gmra.mxu0 %v70
    %v111 = vpop.f32.mrf.mxu0
    %v112 = vadd.f32 %v89, %v111
    %113 = vdwg.mxu0
    %v114 = vmax.f32 %v109, 0.0
    %v115 = vmax.f32 %v112, 0.0
    %v116 = vld [vmem:[%s4] sm:$0xff]
    %v117 = vld [vmem:[%s4 + $0x8] sm:$0xff]
    %v118 = vld [vmem:[%s4 + $0x10] sm:$0xff]
    %v119 = vld [vmem:[%s4 + $0x18] sm:$0xff]
    %v120 = vld [vmem:[%s4 + $0x20] sm:$0xff]
    %v121 = vld [vmem:[%s4 + $0x28] sm:$0xff]
    %v122 = vld [vmem:[%s4 + $0x30] sm:$0xff]
    %v123 = vld [vmem:[%s4 + $0x38] sm:$0xff]
    %v124 = vld [vmem:[%s4 + $0x40] sm:$0xff]
    %v125 = vld [vmem:[%s4 + $0x48] sm:$0xff]
    %v126 = vld [vmem:[%s4 + $0x50] sm:$0xff]
    %v127 = vld [vmem:[%s4 + $0x58] sm:$0xff]
    %v128 = vld [vmem:[%s4 + $0x60] sm:$0xff]
    %v129 = vld [vmem:[%s4 + $0x68] sm:$0xff]
    %v130 = vld [vmem:[%s4 + $0x70] sm:$0xff]
    %v131 = vld [vmem:[%s4 + $0x78] sm:$0xff]
    %132 = vmatpush.msra.mxu0 %v131
    %133 = vmatpush.msra.mxu0 %v130
    %134 = vmatpush.msra.mxu0 %v129
    %135 = vmatpush.msra.mxu0 %v128
    %136 = vmatpush.msra.mxu0 %v127
    %137 = vmatpush.msra.mxu0 %v126
    %138 = vmatpush.msra.mxu0 %v125
    %139 = vmatpush.msra.mxu0 %v124
    %140 = vmatpush.msra.mxu0 %v123
    %141 = vmatpush.msra.mxu0 %v122
    %142 = vmatpush.msra.mxu0 %v121
    %143 = vmatpush.msra.mxu0 %v120
    %144 = vmatpush.msra.mxu0 %v119
    %145 = vmatpush.msra.mxu0 %v118
    %146 = vmatpush.msra.mxu0 %v117
    %147 = vmatpush.msra.mxu0 %v116
    %148 = vmatmul.f32.gmra.mxu0 %v114
    %v149 = vpop.f32.mrf.mxu0
    %v150 = vadd.f32 0.0, %v149
    %151 = vmatmul.f32.gmra.mxu0 %v115
    %v152 = vpop.f32.mrf.mxu0
    %v153 = vadd.f32 0.0, %v152
    %154 = vdwg.mxu0
    %v155 = vpack.c.bf16 %v150, %v150
    %v156 = vpack.c.bf16 %v153, %v153
    %157 = vst [vmem:[%s5] sm:$0xf] %v155
    %158 = vst [vmem:[%s5 + $0x4] sm:$0xf] %v156
  $region29: #{gcn_forward.2} parent=0 // pred_fallthru
    _
  // Predicated region
  $region30: #{gcn_forward.2} parent=0 // pred_check
    _
  $region31: #{gcn_forward.2} parent=0 // pred_check_branch
    %160 = sbr.rel (0) target = $region33
  $region32: #{gcn_forward.2} parent=0 // pred_region
    _
  $region33: #{gcn_forward.2} parent=0 // pred_fallthru
    _
  // Predicated region
  $region34: #{gcn_forward.2} parent=0 // pred_check
    _
  $region35: #{gcn_forward.2} parent=0 // pred_check_branch
    %162 = sbr.rel (0) target = $region37
  $region36: #{gcn_forward.2} parent=0 // pred_region
    _
  $region37: #{gcn_forward.2} parent=0 // pred_fallthru
    _

</llo_original>
